<compile_context>
chip_gen: v7x
topology: tpu7x:2x2x1
jax: 0.10.0
libtpu: 0.0.40
codegen_flags: <defaults>
</compile_context>

<pallas_src>
import math
import numpy as np

import jax
import jax.numpy as jnp
from jax.experimental import pallas as pl
from jax.experimental.pallas import tpu as pltpu


# ----------------------------------------------------------------------------
# Bilinear (fill_up_weights) helper: the depthwise ConvTranspose2d with the
# bilinear kernel is separable:  out_c = Uy @ x_c @ Ux^T  (per channel).
# ----------------------------------------------------------------------------
def _bilinear_1d(size, f):
    """1-D upsampling matrix (size*f, size) matching fill_up_weights +
    ConvTranspose2d(kernel=2f, stride=f, padding=f//2)."""
    pad = f // 2
    ksize = 2 * f
    c = (2 * f - 1 - f % 2) / (2.0 * f)
    w1d = np.array([1.0 - math.fabs(k / f - c) for k in range(ksize)], dtype=np.float32)
    U = np.zeros((size * f, size), dtype=np.float32)
    for oy in range(size * f):
        for iy in range(size):
            k = oy + pad - iy * f
            if 0 <= k < ksize:
                U[oy, iy] = w1d[k]
    return U


def _pick_band(nrows, ncols, max_pixels, row_multiple=1):
    """Largest band height that divides nrows, keeps band_pixels <= max_pixels,
    keeps the output block lane-dense (band_pixels % 128 == 0) and satisfies the
    sublane multiple.  Falls back to the whole image."""
    if nrows * ncols <= max_pixels:
        return nrows
    for bh in range(nrows, 0, -1):
        if nrows % bh:
            continue
        if bh * ncols > max_pixels:
            continue
        if bh % row_multiple:
            continue
        if (bh * ncols) % 128:
            continue
        return bh
    return nrows


def _vmem_limit(bytes_estimate):
    # generous headroom; floored/capped so it is valid on v5e/v6e (128 MiB VMEM)
    # and on v7x (64 MiB VMEM per TensorCore).
    return int(min(max(2 * bytes_estimate + (8 << 20), 16 << 20), 40 << 20))


# ----------------------------------------------------------------------------
# Kernel 1: proj conv (3x3, pad=1) + folded BN + ReLU, banded over output rows.
# Input  : row-padded image   (N, Cin, (H+2)*W)  bf16   (VMEM-resident per batch)
# Output : row-major slab     (N, H,   Cout*W)   bf16   (layout kernel 2 contracts over)
# ----------------------------------------------------------------------------
def _make_proj_kernel(H, W, Cin, Cout, Bh):
    BP = Bh * W            # output pixels per band
    SW = (Bh + 2) * W      # slab width: band + 1-row halo on each side (padded rows)

    def kernel(x_ref, w_ref, s_ref, b_ref, o_ref):
        b = pl.program_id(1)
        start = pl.multiple_of(b * BP, 128) if BP % 128 == 0 else b * BP
        slab = x_ref[0, :, pl.ds(start, SW)]                        # (Cin, SW) bf16

        # column border masks; rows are handled by the zero row padding.
        colx = jax.lax.broadcasted_iota(jnp.int32, (1, BP), 1) % W
        mask_l = colx > 0            # dx = -1 invalid at x == 0
        mask_r = colx < W - 1        # dx = +1 invalid at x == W-1

        zc = jnp.zeros((Cin, 1), slab.dtype)
        sp = jnp.concatenate([zc, slab, zc], axis=1)                # (Cin, SW + 2)
        pieces = []
        for ky in range(3):                                         # ky = dy + 1
            for dx in (-1, 0, 1):
                st = 1 + ky * W + dx
                piece = sp[:, st:st + BP]
                if dx == -1:
                    piece = jnp.where(mask_l, piece, jnp.zeros_like(piece))
                elif dx == 1:
                    piece = jnp.where(mask_r, piece, jnp.zeros_like(piece))
                pieces.append(piece)
        col = jnp.concatenate(pieces, axis=0)                       # (9*Cin, BP) bf16

        acc = jnp.dot(w_ref[...], col, preferred_element_type=jnp.float32)  # (Cout, BP)
        y = jnp.maximum(acc * s_ref[...] + b_ref[...], 0.0)                 # f32

        # pivot to row-major (Bh, Cout*W) so kernel 2 can contract over H in one matmul
        yt = jnp.transpose(y.reshape(Cout, Bh, W), (1, 0, 2)).reshape(Bh, Cout * W)
        o_ref[0] = yt.astype(o_ref.dtype)

    return kernel


def proj_conv(x, wmat, scale, bias, max_band_pixels):
    """x: (N, Cin, H, W) bf16.  Returns proj output as (N, H, Cout*W) bf16."""
    N, Cin, H, W = x.shape
    Cout = wmat.shape[0]
    Bh = _pick_band(H, W, max_band_pixels, row_multiple=8)
    xp = jnp.pad(x, ((0, 0), (0, 0), (1, 1), (0, 0))).reshape(N, Cin, (H + 2) * W)

    est = (Cin * (H + 2) * W * 2 + Cout * 9 * Cin * 2 + Cout * 8
           + 2 * Bh * Cout * W * 2 + 4 * 9 * Cin * Bh * W * 2)

    return pl.pallas_call(
        _make_proj_kernel(H, W, Cin, Cout, Bh),
        out_shape=jax.ShapeDtypeStruct((N, H, Cout * W), jnp.bfloat16),
        grid=(N, H // Bh),
        in_specs=[
            pl.BlockSpec((1, Cin, (H + 2) * W), lambda n, b: (n, 0, 0)),  # resident / batch
            pl.BlockSpec((Cout, 9 * Cin), lambda n, b: (0, 0)),
            pl.BlockSpec((Cout, 1), lambda n, b: (0, 0)),
            pl.BlockSpec((Cout, 1), lambda n, b: (0, 0)),
        ],
        out_specs=pl.BlockSpec((1, Bh, Cout * W), lambda n, b: (n, b, 0)),
        compiler_params=pltpu.CompilerParams(
            dimension_semantics=("parallel", "parallel"),
            vmem_limit_bytes=_vmem_limit(est)),
    )(xp, wmat, scale, bias)


# ----------------------------------------------------------------------------
# Kernel 2 (fused): separable bilinear upsample + skip add + node conv + BN + ReLU,
# banded over output rows.  The upsampled activation never touches HBM.
# ----------------------------------------------------------------------------
def _make_up_node_kernel(Co, H, W, Hf, Wf, Bhf):
    BPf = Bhf * Wf          # output pixels per band
    SH = Bhf + 2            # slab rows: band + 1-row halo on each side (padded rows)

    def kernel(p_ref, skip_ref, uyp_ref, uxT_ref, w_ref, s_ref, b_ref, o_ref):
        b = pl.program_id(1)
        hf0 = b * Bhf

        # --- y-direction upsample: ONE matmul, channels on the lane axis ---
        uy_slab = uyp_ref[pl.ds(hf0, SH), :]                         # (SH, H) bf16
        t = jnp.dot(uy_slab, p_ref[0],                               # (SH, Co*W) f32
                    preferred_element_type=jnp.float32)

        # --- pivot to channel-major, then x-direction upsample: ONE matmul ---
        tt = jnp.transpose(t.reshape(SH, Co, W), (1, 0, 2))          # (Co, SH, W) f32
        z = jnp.dot(tt.reshape(Co * SH, W).astype(jnp.bfloat16), uxT_ref[...],
                    preferred_element_type=jnp.float32)              # (Co*SH, Wf) f32

        # --- fused skip add on the band slab (incl. halo rows) ---
        start = pl.multiple_of(hf0 * Wf, 128) if BPf % 128 == 0 else hf0 * Wf
        skip_slab = skip_ref[0, :, pl.ds(start, SH * Wf)]            # (Co, SH*Wf) bf16
        a = (z.reshape(Co, SH * Wf)
             + skip_slab.astype(jnp.float32)).astype(jnp.bfloat16)   # (Co, SH*Wf)

        # --- 3x3 node conv as ONE flattened im2col matmul ---
        colx = jax.lax.broadcasted_iota(jnp.int32, (1, BPf), 1) % Wf
        mask_l = colx > 0
        mask_r = colx < Wf - 1
        zc = jnp.zeros((Co, 1), a.dtype)
        ap = jnp.concatenate([zc, a, zc], axis=1)                    # (Co, SH*Wf + 2)
        pieces = []
        for ky in range(3):
            for dx in (-1, 0, 1):
                st = 1 + ky * Wf + dx
                piece = ap[:, st:st + BPf]
                if dx == -1:
                    piece = jnp.where(mask_l, piece, jnp.zeros_like(piece))
                elif dx == 1:
                    piece = jnp.where(mask_r, piece, jnp.zeros_like(piece))
                pieces.append(piece)
        col = jnp.concatenate(pieces, axis=0)                        # (9*Co, BPf) bf16

        acc = jnp.dot(w_ref[...], col, preferred_element_type=jnp.float32)  # (Co, BPf)
        y = jnp.maximum(acc * s_ref[...] + b_ref[...], 0.0)
        o_ref[0] = y.astype(o_ref.dtype)                             # lane-dense store

    return kernel


def up_skip_node(p2, skip, f, wmat, scale, bias, max_band_pixels):
    """p2: (N, H, Co*W) bf16 proj output.  skip: (N, Co, Hf, Wf) bf16."""
    N, Co, Hf, Wf = skip.shape
    _, H, CoW = p2.shape
    W = CoW // Co

    if f == 1:
        Uy = np.eye(H, dtype=np.float32)
        Ux = np.eye(W, dtype=np.float32)
    else:
        Uy = _bilinear_1d(H, f)                                      # (Hf, H)
        Ux = _bilinear_1d(W, f)                                      # (Wf, W)
    uy_pad = jnp.asarray(np.pad(Uy, ((1, 1), (0, 0)))).astype(jnp.bfloat16)  # (Hf+2, H)
    uxT = jnp.asarray(Ux.T).astype(jnp.bfloat16)                             # (W, Wf)

    Bhf = _pick_band(Hf, Wf, max_band_pixels, row_multiple=1)
    skip_pad = jnp.pad(skip, ((0, 0), (0, 0), (1, 1), (0, 0))).reshape(
        N, Co, (Hf + 2) * Wf)

    est = (H * Co * W * 2 + Co * (Hf + 2) * Wf * 2 + (Hf + 2) * H * 2 + W * Wf * 2
           + Co * 9 * Co * 2 + Co * 8 + 2 * Co * Bhf * Wf * 2
           + 6 * 9 * Co * Bhf * Wf * 2 + 6 * Co * (Bhf + 2) * Wf * 4)

    out = pl.pallas_call(
        _make_up_node_kernel(Co, H, W, Hf, Wf, Bhf),
        out_shape=jax.ShapeDtypeStruct((N, Co, Hf * Wf), jnp.bfloat16),
        grid=(N, Hf // Bhf),
        in_specs=[
            pl.BlockSpec((1, H, Co * W), lambda n, b: (n, 0, 0)),            # resident
            pl.BlockSpec((1, Co, (Hf + 2) * Wf), lambda n, b: (n, 0, 0)),    # resident
            pl.BlockSpec((Hf + 2, H), lambda n, b: (0, 0)),
            pl.BlockSpec((W, Wf), lambda n, b: (0, 0)),
            pl.BlockSpec((Co, 9 * Co), lambda n, b: (0, 0)),
            pl.BlockSpec((Co, 1), lambda n, b: (0, 0)),
            pl.BlockSpec((Co, 1), lambda n, b: (0, 0)),
        ],
        out_specs=pl.BlockSpec((1, Co, Bhf * Wf), lambda n, b: (n, 0, b)),
        compiler_params=pltpu.CompilerParams(
            dimension_semantics=("parallel", "parallel"),
            vmem_limit_bytes=_vmem_limit(est)),
    )(p2, skip_pad, uy_pad, uxT, wmat, scale, bias)
    return out.reshape(N, Co, Hf, Wf)


# ----------------------------------------------------------------------------
# IDAUp module (Pallas)
# ----------------------------------------------------------------------------
class IDAUpPallas:
    def __init__(self, o, channels, up_f, key, max_band_pixels=2048):
        self.o = int(o)
        self.up_f = [int(f) for f in up_f]
        self.max_band_pixels = int(max_band_pixels)
        self.params = {}
        eps = 1e-5
        for j in range(1, len(channels)):
            c = int(channels[j])
            key, kp, kn = jax.random.split(key, 3)
            prm = {}
            for name, cin, kk in (("proj", c, kp), ("node", self.o, kn)):
                k1, k2, k3 = jax.random.split(kk, 3)
                w = jax.random.normal(k1, (3, 3, cin, self.o), jnp.float32) / np.sqrt(9.0 * cin)
                gamma = 1.0 + 0.1 * jax.random.normal(k2, (self.o,), jnp.float32)
                beta = 0.1 * jax.random.normal(k3, (self.o,), jnp.float32)
                mean = jnp.zeros((self.o,), jnp.float32)
                var = jnp.ones((self.o,), jnp.float32)
                scale = gamma / jnp.sqrt(var + eps)   # eval-mode folded BatchNorm
                bias = beta - mean * scale
                prm[name + "_w"] = w                  # HWIO f32 (reference)
                prm[name + "_scale"] = scale
                prm[name + "_bias"] = bias
                # kernel layout: Wmat[co, (ky*3+kx)*cin + ci] = w[ky, kx, ci, co]
                prm[name + "_wmat"] = (jnp.transpose(w, (3, 0, 1, 2))
                                       .reshape(self.o, 9 * cin).astype(jnp.bfloat16))
                prm[name + "_scale2"] = scale.reshape(self.o, 1)
                prm[name + "_bias2"] = bias.reshape(self.o, 1)
            self.params[j] = prm

    def __call__(self, layers, startp, endp):
        # bfloat16 activations in HBM; f32 accumulation / epilogues inside the kernels.
        layers = [l.astype(jnp.bfloat16) for l in layers]
        for i in range(startp + 1, endp):
            j = i - startp
            prm = self.params[j]
            f = self.up_f[j]
            x = layers[i]                 # (N, Cin, H, W)
            skip = layers[i - 1]          # (N, o, Hf, Wf)
            p2 = proj_conv(x, prm["proj_wmat"], prm["proj_scale2"], prm["proj_bias2"],
                           self.max_band_pixels)                     # (N, H, o*W)
            layers[i] = up_skip_node(p2, skip, f, prm["node_wmat"],
                                     prm["node_scale2"], prm["node_bias2"],
                                     self.max_band_pixels)           # (N, o, Hf, Wf)
        return layers


# ----------------------------------------------------------------------------
# Pure-JAX reference (same bf16 rounding points, standard XLA ops)
# ----------------------------------------------------------------------------
def _ref_conv_bn_relu(x_bf16, w_hwio, scale, bias):
    y = jax.lax.conv_general_dilated(
        x_bf16, w_hwio.astype(jnp.bfloat16),
        window_strides=(1, 1), padding="SAME",
        dimension_numbers=("NCHW", "HWIO", "NCHW"),
        preferred_element_type=jnp.float32)
    return jnp.maximum(y * scale.reshape(1, -1, 1, 1) + bias.reshape(1, -1, 1, 1), 0.0)


def _ref_upsample(x_bf16, f):
    N, C, H, W = x_bf16.shape
    if f == 1:
        Uy = np.eye(H, dtype=np.float32)
        Ux = np.eye(W, dtype=np.float32)
    else:
        Uy = _bilinear_1d(H, f)
        Ux = _bilinear_1d(W, f)
    uy = jnp.asarray(Uy).astype(jnp.bfloat16)            # (Hf, H)
    uxT = jnp.asarray(Ux.T).astype(jnp.bfloat16)         # (W, Wf)
    # rounding points mirror the kernel: y direction first, round to bf16, then x.
    t = jnp.einsum("fh,nchw->ncfw", uy, x_bf16,
                   preferred_element_type=jnp.float32).astype(jnp.bfloat16)
    return jnp.einsum("ncfw,wp->ncfp", t, uxT, preferred_element_type=jnp.float32)


def _ref_forward(ida, layers, startp, endp):
    layers = [l.astype(jnp.bfloat16) for l in layers]
    for i in range(startp + 1, endp):
        j = i - startp
        prm = ida.params[j]
        f = ida.up_f[j]
        p = _ref_conv_bn_relu(layers[i], prm["proj_w"], prm["proj_scale"],
                              prm["proj_bias"]).astype(jnp.bfloat16)
        u = _ref_upsample(p, f)
        a = (u + layers[i - 1].astype(jnp.float32)).astype(jnp.bfloat16)
        y = _ref_conv_bn_relu(a, prm["node_w"], prm["node_scale"], prm["node_bias"])
        layers[i] = y.astype(jnp.bfloat16)
    return layers


# ----------------------------------------------------------------------------
# Main
# ----------------------------------------------------------------------------
if __name__ == "__main__":
    key = jax.random.PRNGKey(0)
    o = 8
    channels = [8, 16, 32]
    up_f = [1, 2, 4]
    N = 2
    base = 32

    k_in, k_par = jax.random.split(key)
    ks = jax.random.split(k_in, len(channels))
    layers = [
        jax.random.normal(ks[i], (N, channels[i], base >> i, base >> i), jnp.float32)
        for i in range(len(channels))
    ]  # NCHW, like PyTorch

    # max_band_pixels=128 is intentionally tiny so the toy shapes exercise the
    # multi-band path; the production default is 2048 (>= 512 lanes per band).
    ida = IDAUpPallas(o, channels, up_f, k_par, max_band_pixels=128)
    out = ida(layers, 0, len(channels))
    out = jax.block_until_ready(out)

    ref = _ref_forward(ida, layers, 0, len(channels))
    for a, b in zip(out, ref):
        np.testing.assert_allclose(np.asarray(a, dtype=np.float32),
                                   np.asarray(b, dtype=np.float32),
                                   rtol=2e-2, atol=2e-2)

    print("KERNEL_OK")
</pallas_src>

<mosaic_0001>
module attributes {stable_mosaic.version = 11 : i64} {
  func.func @kernel(%arg0: i32, %arg1: i32, %arg2: memref<1x16x288xbf16, #tpu.memory_space<vmem>>, %arg3: memref<8x144xbf16, #tpu.memory_space<vmem>>, %arg4: memref<8x1xf32, #tpu.memory_space<vmem>>, %arg5: memref<8x1xf32, #tpu.memory_space<vmem>>, %arg6: memref<1x8x128xbf16, #tpu.memory_space<vmem>>) attributes {dimension_semantics = [#tpu.dimension_semantics<parallel>, #tpu.dimension_semantics<parallel>], iteration_bounds = array<i64: 2, 2>, scalar_prefetch = 0 : i64, scratch_operands = 0 : i64, tpu.core_type = #tpu.core_type<tc>, window_params = [{transform_indices = @transform_0, window_bounds = array<i64: 1, 16, 288>}, {pipeline_mode = #tpu.pipeline_mode<synchronous>, transform_indices = @transform_1, window_bounds = array<i64: 8, 144>}, {pipeline_mode = #tpu.pipeline_mode<synchronous>, transform_indices = @transform_2, window_bounds = array<i64: 8, 1>}, {pipeline_mode = #tpu.pipeline_mode<synchronous>, transform_indices = @transform_3, window_bounds = array<i64: 8, 1>}, {transform_indices = @transform_4, window_bounds = array<i64: 1, 8, 128>}]} {
    %c128_i32 = arith.constant 128 : i32
    %0 = arith.muli %arg1, %c128_i32 : i32
    %1 = tpu.assume_multiple %0, 128 : i32
    %c0 = arith.constant 0 : index
    %c0_0 = arith.constant 0 : index
    %2 = arith.index_cast %1 : i32 to index
    %3 = vector.load %arg2[%c0, %c0_0, %2] : memref<1x16x288xbf16, #tpu.memory_space<vmem>>, vector<1x16x160xbf16>
    %4 = vector.shape_cast %3 : vector<1x16x160xbf16> to vector<16x160xbf16>
    %5 = tpu.iota {dimensions = array<i32: 1>} : vector<1x128xi32>
    %c16_i32 = arith.constant 16 : i32
    %c0_i32 = arith.constant 0 : i32
    %6 = arith.cmpi eq, %c16_i32, %c0_i32 : i32
    %c1_i32 = arith.constant 1 : i32
    %7 = arith.select %6, %c1_i32, %c16_i32 : i32
    %8 = vector.broadcast %7 : i32 to vector<1x128xi32>
    %9 = arith.remsi %5, %8 : vector<1x128xi32>
    %c0_i32_1 = arith.constant 0 : i32
    %10 = vector.broadcast %c0_i32_1 : i32 to vector<1x128xi32>
    %11 = arith.cmpi ne, %9, %10 : vector<1x128xi32>
    %c0_i32_2 = arith.constant 0 : i32
    %12 = vector.broadcast %c0_i32_2 : i32 to vector<1x128xi32>
    %13 = arith.cmpi slt, %9, %12 : vector<1x128xi32>
    %c0_i32_3 = arith.constant 0 : i32
    %14 = arith.cmpi slt, %7, %c0_i32_3 : i32
    %15 = vector.broadcast %14 : i1 to vector<1x128xi1>
    %16 = vector.broadcast %15 : vector<1x128xi1> to vector<1x128xi1>
    %17 = arith.xori %13, %16 : vector<1x128xi1>
    %18 = arith.andi %17, %11 : vector<1x128xi1>
    %19 = vector.broadcast %7 : i32 to vector<1x128xi32>
    %20 = arith.addi %9, %19 : vector<1x128xi32>
    %21 = arith.select %18, %20, %9 : vector<1x128xi1>, vector<1x128xi32>
    %c0_i32_4 = arith.constant 0 : i32
    %22 = vector.broadcast %c0_i32_4 : i32 to vector<1x128xi32>
    %23 = arith.cmpi sgt, %21, %22 : vector<1x128xi32>
    %c15_i32 = arith.constant 15 : i32
    %24 = vector.broadcast %c15_i32 : i32 to vector<1x128xi32>
    %25 = arith.cmpi slt, %21, %24 : vector<1x128xi32>
    %cst = arith.constant 0.000000e+00 : bf16
    %26 = vector.broadcast %cst : bf16 to vector<16x1xbf16>
    %27 = tpu.concatenate %26, %4, %26 in 1 : vector<16x1xbf16>, vector<16x160xbf16>, vector<16x1xbf16> -> vector<16x162xbf16>
    %28 = vector.extract_strided_slice %27 {offsets = [0, 0], sizes = [16, 128], strides = [1, 1]} : vector<16x162xbf16> to vector<16x128xbf16>
    %cst_5 = arith.constant 0.000000e+00 : bf16
    %29 = vector.broadcast %cst_5 : bf16 to vector<16x128xbf16>
    %30 = vector.shape_cast %23 : vector<1x128xi1> to vector<1x128xi1>
    %31 = vector.broadcast %30 : vector<1x128xi1> to vector<16x128xi1>
    %32 = arith.select %31, %28, %29 : vector<16x128xi1>, vector<16x128xbf16>
    %33 = vector.extract_strided_slice %27 {offsets = [0, 1], sizes = [16, 128], strides = [1, 1]} : vector<16x162xbf16> to vector<16x128xbf16>
    %34 = vector.extract_strided_slice %27 {offsets = [0, 2], sizes = [16, 128], strides = [1, 1]} : vector<16x162xbf16> to vector<16x128xbf16>
    %cst_6 = arith.constant 0.000000e+00 : bf16
    %35 = vector.broadcast %cst_6 : bf16 to vector<16x128xbf16>
    %36 = vector.shape_cast %25 : vector<1x128xi1> to vector<1x128xi1>
    %37 = vector.broadcast %36 : vector<1x128xi1> to vector<16x128xi1>
    %38 = arith.select %37, %34, %35 : vector<16x128xi1>, vector<16x128xbf16>
    %39 = vector.extract_strided_slice %27 {offsets = [0, 16], sizes = [16, 128], strides = [1, 1]} : vector<16x162xbf16> to vector<16x128xbf16>
    %cst_7 = arith.constant 0.000000e+00 : bf16
    %40 = vector.broadcast %cst_7 : bf16 to vector<16x128xbf16>
    %41 = vector.shape_cast %23 : vector<1x128xi1> to vector<1x128xi1>
    %42 = vector.broadcast %41 : vector<1x128xi1> to vector<16x128xi1>
    %43 = arith.select %42, %39, %40 : vector<16x128xi1>, vector<16x128xbf16>
    %44 = vector.extract_strided_slice %27 {offsets = [0, 17], sizes = [16, 128], strides = [1, 1]} : vector<16x162xbf16> to vector<16x128xbf16>
    %45 = vector.extract_strided_slice %27 {offsets = [0, 18], sizes = [16, 128], strides = [1, 1]} : vector<16x162xbf16> to vector<16x128xbf16>
    %cst_8 = arith.constant 0.000000e+00 : bf16
    %46 = vector.broadcast %cst_8 : bf16 to vector<16x128xbf16>
    %47 = vector.shape_cast %25 : vector<1x128xi1> to vector<1x128xi1>
    %48 = vector.broadcast %47 : vector<1x128xi1> to vector<16x128xi1>
    %49 = arith.select %48, %45, %46 : vector<16x128xi1>, vector<16x128xbf16>
    %50 = vector.extract_strided_slice %27 {offsets = [0, 32], sizes = [16, 128], strides = [1, 1]} : vector<16x162xbf16> to vector<16x128xbf16>
    %cst_9 = arith.constant 0.000000e+00 : bf16
    %51 = vector.broadcast %cst_9 : bf16 to vector<16x128xbf16>
    %52 = vector.shape_cast %23 : vector<1x128xi1> to vector<1x128xi1>
    %53 = vector.broadcast %52 : vector<1x128xi1> to vector<16x128xi1>
    %54 = arith.select %53, %50, %51 : vector<16x128xi1>, vector<16x128xbf16>
    %55 = vector.extract_strided_slice %27 {offsets = [0, 33], sizes = [16, 128], strides = [1, 1]} : vector<16x162xbf16> to vector<16x128xbf16>
    %56 = vector.extract_strided_slice %27 {offsets = [0, 34], sizes = [16, 128], strides = [1, 1]} : vector<16x162xbf16> to vector<16x128xbf16>
    %cst_10 = arith.constant 0.000000e+00 : bf16
    %57 = vector.broadcast %cst_10 : bf16 to vector<16x128xbf16>
    %58 = vector.shape_cast %25 : vector<1x128xi1> to vector<1x128xi1>
    %59 = vector.broadcast %58 : vector<1x128xi1> to vector<16x128xi1>
    %60 = arith.select %59, %56, %57 : vector<16x128xi1>, vector<16x128xbf16>
    %61 = tpu.concatenate %32, %33, %38, %43, %44, %49, %54, %55, %60 in 0 : vector<16x128xbf16>, vector<16x128xbf16>, vector<16x128xbf16>, vector<16x128xbf16>, vector<16x128xbf16>, vector<16x128xbf16>, vector<16x128xbf16>, vector<16x128xbf16>, vector<16x128xbf16> -> vector<144x128xbf16>
    %c0_11 = arith.constant 0 : index
    %c0_12 = arith.constant 0 : index
    %62 = vector.load %arg3[%c0_11, %c0_12] : memref<8x144xbf16, #tpu.memory_space<vmem>>, vector<8x144xbf16>
    %cst_13 = arith.constant dense<0.000000e+00> : vector<8x128xf32>
    %63 = tpu.matmul %62, %61, %cst_13 {dimension_numbers = #tpu.dot_dimension_numbers<[1], [0], [0], [1], [0, 0, 1, 1], [], []>} : vector<8x144xbf16>, vector<144x128xbf16>, vector<8x128xf32> -> vector<8x128xf32>
    %c0_14 = arith.constant 0 : index
    %c0_15 = arith.constant 0 : index
    %64 = vector.load %arg4[%c0_14, %c0_15] : memref<8x1xf32, #tpu.memory_space<vmem>>, vector<8x1xf32>
    %65 = vector.broadcast %64 : vector<8x1xf32> to vector<8x128xf32>
    %66 = arith.mulf %63, %65 : vector<8x128xf32>
    %c0_16 = arith.constant 0 : index
    %c0_17 = arith.constant 0 : index
    %67 = vector.load %arg5[%c0_16, %c0_17] : memref<8x1xf32, #tpu.memory_space<vmem>>, vector<8x1xf32>
    %68 = vector.broadcast %67 : vector<8x1xf32> to vector<8x128xf32>
    %69 = arith.addf %66, %68 : vector<8x128xf32>
    %cst_18 = arith.constant 0.000000e+00 : f32
    %70 = vector.broadcast %cst_18 : f32 to vector<8x128xf32>
    %71 = arith.maximumf %69, %70 : vector<8x128xf32>
    %72 = vector.shape_cast %71 : vector<8x128xf32> to vector<8x8x16xf32>
    %73 = tpu.transpose %72, [1, 0, 2] : vector<8x8x16xf32> -> vector<8x8x16xf32>
    %74 = vector.shape_cast %73 : vector<8x8x16xf32> to vector<8x128xf32>
    %75 = arith.truncf %74 : vector<8x128xf32> to vector<8x128xbf16>
    %c0_19 = arith.constant 0 : index
    %c0_20 = arith.constant 0 : index
    %c0_21 = arith.constant 0 : index
    %76 = vector.load %arg6[%c0_19, %c0_20, %c0_21] : memref<1x8x128xbf16, #tpu.memory_space<vmem>>, vector<1x8x128xbf16>
    %77 = vector.shape_cast %76 : vector<1x8x128xbf16> to vector<8x128xbf16>
    %78 = vector.shape_cast %75 : vector<8x128xbf16> to vector<1x8x128xbf16>
    tpu.vector_store %arg6[%c0_19, %c0_20, %c0_21], %78 {strides = array<i32>} : memref<1x8x128xbf16, #tpu.memory_space<vmem>>, vector<1x8x128xbf16>,
    return
  }
  func.func @transform_0(%arg0: i32, %arg1: i32) -> (i32, i32, i32) {
    %c0_i32 = arith.constant 0 : i32
    %c0_i32_0 = arith.constant 0 : i32
    %c0_i32_1 = arith.constant 0 : i32
    return %arg0, %c0_i32, %c0_i32_0 : i32, i32, i32
  }
  func.func @transform_1(%arg0: i32, %arg1: i32) -> (i32, i32) {
    %c0_i32 = arith.constant 0 : i32
    %c0_i32_0 = arith.constant 0 : i32
    %c0_i32_1 = arith.constant 0 : i32
    return %c0_i32, %c0_i32_0 : i32, i32
  }
  func.func @transform_2(%arg0: i32, %arg1: i32) -> (i32, i32) {
    %c0_i32 = arith.constant 0 : i32
    %c0_i32_0 = arith.constant 0 : i32
    %c0_i32_1 = arith.constant 0 : i32
    return %c0_i32, %c0_i32_0 : i32, i32
  }
  func.func @transform_3(%arg0: i32, %arg1: i32) -> (i32, i32) {
    %c0_i32 = arith.constant 0 : i32
    %c0_i32_0 = arith.constant 0 : i32
    %c0_i32_1 = arith.constant 0 : i32
    return %c0_i32, %c0_i32_0 : i32, i32
  }
  func.func @transform_4(%arg0: i32, %arg1: i32) -> (i32, i32, i32) {
    %c0_i32 = arith.constant 0 : i32
    %c0_i32_0 = arith.constant 0 : i32
    return %arg0, %arg1, %c0_i32 : i32, i32, i32
  }
}

</mosaic_0001>

<llo_original>
// kernel: tpu_custom_call.1
$region0: #{tpu_custom_call.1}
  #allocation0 [shape = 'u32[]', space=smem, size = 0x4, offset = 0x4, fixed_abs, tag = 'smem constant byte address 0x4 - core index']
  #allocation1 [shape = 'u32[144,128]{1,0:T(1,128)}', space=vmem, size = 0x12000, scoped, tag = 'internal scratch']
  %s0 = inlined_call_operand.hbm [shape: bf16[2,16,288], index: 0, kind: input, shape index: {}]
  %s1 = inlined_call_operand.vmem [shape: bf16[8,144], index: 1, kind: input, shape index: {}]
  %s2 = inlined_call_operand.vmem [shape: f32[8,1], index: 2, kind: input, shape index: {}]
  %s3 = inlined_call_operand.vmem [shape: f32[8,1], index: 3, kind: input, shape index: {}]
  %s4 = inlined_call_operand.hbm [shape: bf16[2,16,128], index: 4, kind: output, shape index: {}]
  %s5 = sld [smem:[#allocation0]]
  $region53: #{tpu_custom_call.1} parent=0
    _
  %s7 = ssub.s32 1, %s5
  %s8 = scalar_select 0, %s7, %s5
  $region1: #{tpu_custom_call.1} parent=0
    #allocation2 [shape = 'u8[24576]{0}', space=vmem, size = 0x6000, scoped, tag = 'input window, operand 0']
    #allocation3 [shape = 's32[2]{0}', space=sflag, size = 0x8, scoped, tag = 'scoped memory for tpu_custom_call.1']
    #allocation4 [shape = 's32[2]{0}', space=sflag, size = 0x8, scoped, tag = 'scoped memory for tpu_custom_call.1']
    #allocation5 [shape = 'u8[4096]{0}', space=vmem, size = 0x1000, scoped, tag = 'output window, operand 0']
    %9 = vsyncpa [#allocation3], 0
    %s10 = scalar_lea.sflag [#allocation3], 1
    %11 = vsyncpa %s10, 0
    %12 = vsyncpa [#allocation4], 0
    %s13 = scalar_lea.sflag [#allocation4], 1
    %14 = vsyncpa %s13, 0
    loop: start=0, step=1, limit=6
    $region2: #{tpu_custom_call.1} parent=1 // loop_pre_header
      _
    $region3: #{tpu_custom_call.1} parent=1 // loop_header
      %s16 = sphi 0, %s20
      %p17 = scmp.ge.s32.totalorder %s16, 6
      %s23 = sphi 0, %s35
      %s24 = sphi 0, %s31
      %s25 = sphi 0, %s23
      %s26 = sphi 0, %s24
      %s27 = sphi 0, %s25
      %s28 = sphi 0, %s26
      %s38 = sphi 0, %s40
      %s41 = sphi 0, %s38
      %s42 = sphi 0, %s41
      %s58 = sphi 0, %s42
      %s62 = sphi 0, %s62
      %s64 = sphi 0, %s62
      %s65 = sphi 0, %s64
      %s79 = sphi 0, %s65
      %s83 = sphi 0, %s83
      %s85 = sphi 0, %s83
      %s86 = sphi 0, %s85
      %s100 = sphi 0, %s86
      %s104 = sphi 0, %s104
      %s106 = sphi 0, %s104
      %s107 = sphi 0, %s106
      %s121 = sphi 0, %s107
      %s129 = sphi 0, %s131
      %s132 = sphi 0, %s129
      %s133 = sphi 0, %s132
      %s149 = sphi 0, %s133
    $region4: #{tpu_custom_call.1} parent=1 // loop_header_branch
      %19 = sbr.rel (%p17) target = $region8
    $region5: #{tpu_custom_call.1} parent=1 // loop_body
      %s21 = ssub.s32 %s16, 1
      %s22 = ssub.s32 %s16, 2
      %s29 = sadd.s32 1, %s24
      %p30 = scmp.ge.s32.totalorder %s29, 2
      %s31 = scalar_select %p30, 0, %s29
      %s32 = sadd.s32 1, %s23
      %s33 = scalar_select %p30, %s32, %s23
      %p34 = scmp.ge.s32.totalorder %s33, 2
      %s35 = scalar_select %p34, 0, %s33
      %s36 = ssub.s32 %s23, %s35
      %p37 = scmp.eq.s32.totalorder %s36, 0
      %s39 = sadd.s32 %s38, 1
      %s40 = scalar_select %p37, %s38, %s39
      %p43 = pneg %p37
      %p44 = scmp.eq.s32.totalorder %s16, 3
      %p45 = por %p43, %p44
      %p46 = scmp.ne.s32.totalorder %s38, %s41
      %p47 = scmp.eq.s32.totalorder %s16, 0
      %p48 = por %p46, %p47
      %p49 = scmp.ne.s32.totalorder %s38, %s41
      %p50 = scmp.eq.s32.totalorder %s21, 3
      %p51 = por %p49, %p50
      %p52 = scmp.ne.s32.totalorder %s41, %s42
      %p53 = scmp.eq.s32.totalorder %s21, 0
      %p54 = por %p52, %p53
      %p55 = scmp.ne.s32.totalorder %s41, %s42
      %p56 = scmp.eq.s32.totalorder %s22, 3
      %p57 = por %p55, %p56
      %p59 = scmp.ne.s32.totalorder %s42, %s58
      %p60 = scmp.eq.s32.totalorder %s22, 0
      %p61 = por %p59, %p60
      %s63 = sadd.s32 %s62, 1
      %p66 = scmp.eq.s32.totalorder %s16, 3
      %p67 = scmp.ne.s32.totalorder %s62, %s64
      %p68 = scmp.eq.s32.totalorder %s16, 0
      %p69 = por %p67, %p68
      %p70 = scmp.ne.s32.totalorder %s62, %s64
      %p71 = scmp.eq.s32.totalorder %s21, 3
      %p72 = por %p70, %p71
      %p73 = scmp.ne.s32.totalorder %s64, %s65
      %p74 = scmp.eq.s32.totalorder %s21, 0
      %p75 = por %p73, %p74
      %p76 = scmp.ne.s32.totalorder %s64, %s65
      %p77 = scmp.eq.s32.totalorder %s22, 3
      %p78 = por %p76, %p77
      %p80 = scmp.ne.s32.totalorder %s65, %s79
      %p81 = scmp.eq.s32.totalorder %s22, 0
      %p82 = por %p80, %p81
      %s84 = sadd.s32 %s83, 1
      %p87 = scmp.eq.s32.totalorder %s16, 3
      %p88 = scmp.ne.s32.totalorder %s83, %s85
      %p89 = scmp.eq.s32.totalorder %s16, 0
      %p90 = por %p88, %p89
      %p91 = scmp.ne.s32.totalorder %s83, %s85
      %p92 = scmp.eq.s32.totalorder %s21, 3
      %p93 = por %p91, %p92
      %p94 = scmp.ne.s32.totalorder %s85, %s86
      %p95 = scmp.eq.s32.totalorder %s21, 0
      %p96 = por %p94, %p95
      %p97 = scmp.ne.s32.totalorder %s85, %s86
      %p98 = scmp.eq.s32.totalorder %s22, 3
      %p99 = por %p97, %p98
      %p101 = scmp.ne.s32.totalorder %s86, %s100
      %p102 = scmp.eq.s32.totalorder %s22, 0
      %p103 = por %p101, %p102
      %s105 = sadd.s32 %s104, 1
      %p108 = scmp.eq.s32.totalorder %s16, 3
      %p109 = scmp.ne.s32.totalorder %s104, %s106
      %p110 = scmp.eq.s32.totalorder %s16, 0
      %p111 = por %p109, %p110
      %p112 = scmp.ne.s32.totalorder %s104, %s106
      %p113 = scmp.eq.s32.totalorder %s21, 3
      %p114 = por %p112, %p113
      %p115 = scmp.ne.s32.totalorder %s106, %s107
      %p116 = scmp.eq.s32.totalorder %s21, 0
      %p117 = por %p115, %p116
      %p118 = scmp.ne.s32.totalorder %s106, %s107
      %p119 = scmp.eq.s32.totalorder %s22, 3
      %p120 = por %p118, %p119
      %p122 = scmp.ne.s32.totalorder %s107, %s121
      %p123 = scmp.eq.s32.totalorder %s22, 0
      %p124 = por %p122, %p123
      %s125 = ssub.s32 %s23, %s35
      %s126 = ssub.s32 %s24, %s31
      %s127 = sor.u32 %s125, %s126
      %p128 = scmp.eq.s32.totalorder %s127, 0
      %s130 = sadd.s32 %s129, 1
      %s131 = scalar_select %p128, %s129, %s130
      %p134 = pneg %p128
      %p135 = scmp.eq.s32.totalorder %s16, 3
      %p136 = por %p134, %p135
      %p137 = scmp.ne.s32.totalorder %s129, %s132
      %p138 = scmp.eq.s32.totalorder %s16, 0
      %p139 = por %p137, %p138
      %p140 = scmp.ne.s32.totalorder %s129, %s132
      %p141 = scmp.eq.s32.totalorder %s21, 3
      %p142 = por %p140, %p141
      %p143 = scmp.ne.s32.totalorder %s132, %s133
      %p144 = scmp.eq.s32.totalorder %s21, 0
      %p145 = por %p143, %p144
      %p146 = scmp.ne.s32.totalorder %s132, %s133
      %p147 = scmp.eq.s32.totalorder %s22, 3
      %p148 = por %p146, %p147
      %p150 = scmp.ne.s32.totalorder %s133, %s149
      %p151 = scmp.eq.s32.totalorder %s22, 0
      %p152 = por %p150, %p151
      %p153 = scmp.le.s32.totalorder 1, %s16
      %p154 = scmp.lt.s32.totalorder %s16, 5
      %p155 = pnand %p153, %p154
      %p156 = pneg %p155
      // Predicated region
      $region9: #{tpu_custom_call.1} parent=5 // pred_check
        _
      $region10: #{tpu_custom_call.1} parent=5 // pred_check_branch
        %158 = sbr.rel (%p155) target = $region12
      $region11: #{tpu_custom_call.1} parent=5 // pred_region
        %s159 = ssub.s32 %s16, 1
        // Predicated region
        $region13: #{tpu_custom_call.1} parent=11 // pred_check
          %p160 = pneg %p75
        $region14: #{tpu_custom_call.1} parent=11 // pred_check_branch
          %162 = sbr.rel (%p160) target = $region16
        $region15: #{tpu_custom_call.1} parent=11 // pred_region
          _
        $region16: #{tpu_custom_call.1} parent=11 // pred_fallthru
          _
        // Predicated region
        $region17: #{tpu_custom_call.1} parent=11 // pred_check
          %p163 = pneg %p96
        $region18: #{tpu_custom_call.1} parent=11 // pred_check_branch
          %165 = sbr.rel (%p163) target = $region20
        $region19: #{tpu_custom_call.1} parent=11 // pred_region
          _
        $region20: #{tpu_custom_call.1} parent=11 // pred_fallthru
          _
        // Predicated region
        $region21: #{tpu_custom_call.1} parent=11 // pred_check
          %p166 = pneg %p117
        $region22: #{tpu_custom_call.1} parent=11 // pred_check_branch
          %168 = sbr.rel (%p166) target = $region24
        $region23: #{tpu_custom_call.1} parent=11 // pred_region
          _
        $region24: #{tpu_custom_call.1} parent=11 // pred_fallthru
          _
      $region12: #{tpu_custom_call.1} parent=5 // pred_fallthru
        _
      %p169 = scmp.lt.s32.totalorder %s16, 4
      // Predicated region
      $region25: #{tpu_custom_call.1} parent=5 // pred_check
        %p170 = pneg %p169
      $region26: #{tpu_custom_call.1} parent=5 // pred_check_branch
        %172 = sbr.rel (%p170) target = $region28
      $region27: #{tpu_custom_call.1} parent=5 // pred_region
        // Predicated region
        $region29: #{tpu_custom_call.1} parent=27 // pred_check
          %p173 = pneg %p48
        $region30: #{tpu_custom_call.1} parent=27 // pred_check_branch
          %175 = sbr.rel (%p173) target = $region32
        $region31: #{tpu_custom_call.1} parent=27 // pred_region
          %s176 = sand.u32 %s38, 1
          %s177 = scalar_lea.sflag [#allocation3], %s176
          %s178 = sand.u32 %s38, 1
          %s179 = smul.addr %s178, 24
          %s180 = scalar_lea.vmem [#allocation2], %s179
          %s182 = ssub.s32 384, 384
          %183 = vsyncadd %s177, %s182
          %s184 = smul.addr %s23, 6
          %s185 = smul.addr %s184, 64
          %s186 = scalar_lea.hbm %s0, %s185
          %s187 = sshll.u32 %s180, 4
          %s188 = int_to_ptr.vmem [resolvable:$true] %s187
          %193 = dma.hbm_to_vmem [thread:$0]  %s186, 384, %s188, %s177, 192, 192, 12
        $region32: #{tpu_custom_call.1} parent=27 // pred_fallthru
          _
      $region28: #{tpu_custom_call.1} parent=5 // pred_fallthru
        _
      %p194 = scmp.le.s32.totalorder 1, %s16
      %p195 = scmp.lt.s32.totalorder %s16, 5
      %p196 = pnand %p194, %p195
      %p197 = pneg %p196
      // Predicated region
      $region33: #{tpu_custom_call.1} parent=5 // pred_check
        _
      $region34: #{tpu_custom_call.1} parent=5 // pred_check_branch
        %199 = sbr.rel (%p196) target = $region36
      $region35: #{tpu_custom_call.1} parent=5 // pred_region
        %s200 = ssub.s32 %s16, 1
        %s201 = sand.u32 %s41, 1
        %s202 = scalar_lea.sflag [#allocation3], %s201
        %s203 = sand.u32 %s41, 1
        %s204 = smul.addr %s203, 24
        %s205 = scalar_lea.vmem [#allocation2], %s204
        // Predicated region
        $region37: #{tpu_custom_call.1} parent=35 // pred_check
          %p206 = pneg %p54
        $region38: #{tpu_custom_call.1} parent=35 // pred_check_branch
          %208 = sbr.rel (%p206) target = $region40
        $region39: #{tpu_custom_call.1} parent=35 // pred_region
          %209 = dma.done %s202, 384
        $region40: #{tpu_custom_call.1} parent=35 // pred_fallthru
          _
        %s210 = sand.u32 %s41, 1
        %s211 = scalar_lea.sflag [#allocation3], %s210
        %s212 = sand.u32 %s41, 1
        %s213 = smul.addr %s212, 24
        %s214 = scalar_lea.vmem [#allocation2], %s213
        %p215 = pneg %p54
        %p216 = pneg %p51
        %p217 = pneg %p75
        %p218 = pneg %p72
        %p219 = pneg %p96
        %p220 = pneg %p93
        %p221 = pneg %p117
        %p222 = pneg %p114
        %p223 = pneg %p145
        %p224 = pneg %p142
        %s225 = sand.u32 %s132, 1
        %s226 = scalar_lea.sflag [#allocation4], %s225
        %s227 = sand.u32 %s132, 1
        %s228 = smul.addr %s227, 4
        %s229 = scalar_lea.vmem [#allocation5], %s228
        %s233 = smul.u32 %s26, 128
        %s234 = sshra.s32 %s233, 7
        %s235 = sand.u32 %s233, 127
        %s236 = smul.addr %s234, 4
        %s237 = scalar_lea.vmem %s205, %s236 [#allocation2]
        %v238 = vld [vmem:[%s237] sm:$0xff]
        %v239 = vld [vmem:[%s237 + $0xc] sm:$0xff]
        %v240 = vlaneseq
        %v241 = vand.u32 %v240, 127
        %vm242 = vcmp.lt.s32.totalorder %v241, 0
        %v243 = vsub.s32 0, %v241
        %v244 = vsel %vm242, %v243, %v241
        %v245 = vshrl.u32 %v244, 4
        %v246 = vand.u32 %v244, 15
        %v247 = vsub.s32 0, %v246
        %v248 = vsel %vm242, %v247, %v246
        %vm249 = vcmp.ne.s32.totalorder %v248, 0
        %vm250 = vcmp.lt.s32.totalorder %v248, 0
        %vm251 = vmand %vm250, %vm249
        %v252 = vadd.s32 %v248, 16
        %v253 = vsel %vm251, %v252, %v248
        %vm254 = vcmp.gt.s32.totalorder %v253, 0
        %vm255 = vcmp.lt.s32.totalorder %v253, 15
        %v258 = vunpack.c.l.b16 %v238
        %v259 = vunpack.c.h.b16 %v238
        %v260 = vunpack.c.l.b16 %v239
        %v261 = vunpack.c.h.b16 %v239
        %v262 = vpack.c.b16 %v260, %v258
        %v263 = vpack.c.b16 %v261, %v259
        %264 = vrot.lane.b32.xlu0 %v262, 1
        %v265 = vpop.permute.xlu0 %264
        %266 = vrot.lane.b32.xlu0 %v263, 1
        %v267 = vpop.permute.xlu0 %266
        %vm268 = vcmask 7168
        %v269 = vsel %vm268, %v265, %v267
        %vm270 = vcmask 7168
        %v273 = vsel %vm270, 0, %v265
        %vm275 = vcmask 269312
        %v277 = vsel %vm275, %v269, 0
        %v279 = vsel %vm254, 1, 0
        %vm280 = vcmp.eq.s32.totalorder %v279, 1
        %vm281 = vmpackc.low %vm280, %vm280
        %v282 = vsel %vm281, 65537, 0
        %v283 = vlaneseq
        %v284 = vshrl.u32 %v283, 7
        %v285 = vsub.s32 0, %v284
        %v286 = vrot.slane %v282, %v285
        %vm287 = vcmp.ne.s16.totalorder %v286, 0
        %v288 = vsel %vm287, %v273, 0
        %v289 = vsel %vm255, 1, 0
        %vm290 = vcmp.eq.s32.totalorder %v289, 1
        %vm291 = vmpackc.low %vm290, %vm290
        %v292 = vsel %vm291, 65537, 0
        %v293 = vlaneseq
        %v294 = vshrl.u32 %v293, 7
        %v295 = vsub.s32 0, %v294
        %v296 = vrot.slane %v292, %v295
        %297 = vrot.lane.b32.xlu0 %v296, 2
        %v298 = vpop.permute.xlu0 %297
        %vm299 = vcmp.ne.s16.totalorder %v298, 0
        %v300 = vsel %vm299, %v273, 0
        %v301 = vsel %vm299, %v277, 0
        %302 = vrot.lane.b32.xlu0 %v286, 16
        %v303 = vpop.permute.xlu0 %302
        %vm304 = vcmp.ne.s16.totalorder %v303, 0
        %v305 = vsel %vm304, %v273, 0
        %v306 = vsel %vm304, %v277, 0
        %307 = vrot.lane.b32.xlu0 %v296, 18
        %v308 = vpop.permute.xlu0 %307
        %vm309 = vcmp.ne.s16.totalorder %v308, 0
        %v310 = vsel %vm309, %v273, 0
        %v311 = vsel %vm309, %v277, 0
        %312 = vrot.lane.b32.xlu0 %v286, 32
        %v313 = vpop.permute.xlu0 %312
        %vm314 = vcmp.ne.s16.totalorder %v313, 0
        %v315 = vsel %vm314, %v273, 0
        %v316 = vsel %vm314, %v277, 0
        %317 = vrot.lane.b32.xlu0 %v296, 34
        %v318 = vpop.permute.xlu0 %317
        %vm319 = vcmp.ne.s16.totalorder %v318, 0
        %v320 = vsel %vm319, %v273, 0
        %v321 = vsel %vm319, %v277, 0
        %324 = vrot.lane.b32.xlu0 %v273, 127
        %v325 = vpop.permute.xlu0 %324
        %326 = vrot.lane.b32.xlu0 %v277, 127
        %v327 = vpop.permute.xlu0 %326
        %vm328 = vcmask 1039360
        %v329 = vsel %vm328, %v325, %v327
        %333 = vrot.lane.b32.xlu0 %v300, 126
        %v334 = vpop.permute.xlu0 %333
        %335 = vrot.lane.b32.xlu0 %v301, 126
        %v336 = vpop.permute.xlu0 %335
        %vm337 = vcmask 1031168
        %v338 = vsel %vm337, %v334, %v336
        %342 = vrot.lane.b32.xlu0 %v305, 112
        %v343 = vpop.permute.xlu0 %342
        %344 = vrot.lane.b32.xlu0 %v306, 112
        %v345 = vpop.permute.xlu0 %344
        %vm346 = vcmask 916480
        %v347 = vsel %vm346, %v343, %v345
        %349 = vrot.lane.b32.xlu0 %v273, 111
        %v350 = vpop.permute.xlu0 %349
        %351 = vrot.lane.b32.xlu0 %v277, 111
        %v352 = vpop.permute.xlu0 %351
        %vm353 = vcmask 908288
        %v354 = vsel %vm353, %v350, %v352
        %358 = vrot.lane.b32.xlu0 %v310, 110
        %v359 = vpop.permute.xlu0 %358
        %360 = vrot.lane.b32.xlu0 %v311, 110
        %v361 = vpop.permute.xlu0 %360
        %vm362 = vcmask 900096
        %v363 = vsel %vm362, %v359, %v361
        %367 = vrot.lane.b32.xlu0 %v315, 96
        %v368 = vpop.permute.xlu0 %367
        %369 = vrot.lane.b32.xlu0 %v316, 96
        %v370 = vpop.permute.xlu0 %369
        %vm371 = vcmask 785408
        %v372 = vsel %vm371, %v368, %v370
        %374 = vrot.lane.b32.xlu0 %v273, 95
        %v375 = vpop.permute.xlu0 %374
        %376 = vrot.lane.b32.xlu0 %v277, 95
        %v377 = vpop.permute.xlu0 %376
        %vm378 = vcmask 777216
        %v379 = vsel %vm378, %v375, %v377
        %383 = vrot.lane.b32.xlu0 %v320, 94
        %v384 = vpop.permute.xlu0 %383
        %385 = vrot.lane.b32.xlu0 %v321, 94
        %v386 = vpop.permute.xlu0 %385
        %vm387 = vcmask 769024
        %v388 = vsel %vm387, %v384, %v386
        %v390 = vld [vmem:[%s1] sm:$0xff]
        %v392 = vunpack.c.l.b16 %v390
        %v393 = vunpack.c.h.b16 %v390
        %v394 = vpack.c.b16 %v392, %v392
        %v395 = vpack.c.b16 %v393, %v393
        %vm397 = vcmask 130048
        %v399 = vsel %vm397, %v395, 0
        %401 = vmatprep.subr.bf16.mxu0 0
        %402 = vmatpush1.bf16.msra.mxu0 %v288
        %403 = vmatprep.subr.bf16.mxu0 0
        %404 = vmatpush1.bf16.msra.mxu0 %v329
        %405 = vmatprep.subr.bf16.mxu0 0
        %406 = vmatpush1.bf16.msra.mxu0 %v338
        %407 = vmatprep.subr.bf16.mxu0 0
        %408 = vmatpush1.bf16.msra.mxu0 %v347
        %409 = vmatprep.subr.bf16.mxu0 0
        %410 = vmatpush1.bf16.msra.mxu0 %v354
        %411 = vmatprep.subr.bf16.mxu0 0
        %412 = vmatpush1.bf16.msra.mxu0 %v363
        %413 = vmatprep.subr.bf16.mxu0 0
        %414 = vmatpush1.bf16.msra.mxu0 %v372
        %415 = vmatprep.subr.bf16.mxu0 0
        %416 = vmatpush1.bf16.msra.mxu0 %v379
        %417 = vmatprep.subr.bf16.mxu0 0
        %418 = vmatpush1.bf16.msra.mxu0 %v388
        %419 = vmatprep.subr.bf16.mxu0 0
        %420 = vmatpush1.bf16.msra.mxu0 0
        %421 = vmatprep.subr.bf16.mxu0 0
        %422 = vmatpush1.bf16.msra.mxu0 0
        %423 = vmatprep.subr.bf16.mxu0 0
        %424 = vmatpush1.bf16.msra.mxu0 0
        %425 = vmatprep.subr.bf16.mxu0 0
        %426 = vmatpush1.bf16.msra.mxu0 0
        %427 = vmatprep.subr.bf16.mxu0 0
        %428 = vmatpush1.bf16.msra.mxu0 0
        %429 = vmatprep.subr.bf16.mxu0 0
        %430 = vmatpush1.bf16.msra.mxu0 0
        %431 = vmatprep.subr.bf16.mxu0 0
        %432 = vmatpush1.bf16.msra.mxu0 0
        %433 = vmatprep.mubr.bf16.mxu0 %v399
        %434 = vmatmul.mubr.bf16.gmra.mrb[0].mxu0 %v394
        %v435 = vpop.f32.mrb[0].mxu0
        %v436 = vadd.f32 0.0, %v435
        %v437 = vpop.f32.mrb[0].mxu0
        %v438 = vpop.f32.mrb[0].mxu0
        %v439 = vpop.f32.mrb[0].mxu0
        %440 = vdwg.mxu0
        %v441 = vld [vmem:[%s2] sm:$0xff]
        %443 = vset.pattern.permute.xlu0 0
        %444 = vperm.xlu0 %443, %v441
        %v445 = vpop.permute.xlu0 %444
        %v447 = vmul.f32 %v436, %v445
        %v448 = vld [vmem:[%s3] sm:$0xff]
        %450 = vset.pattern.permute.xlu0 0
        %451 = vperm.xlu0 %450, %v448
        %v452 = vpop.permute.xlu0 %451
        %v454 = vadd.f32 %v447, %v452
        %v455 = vmax.f32 %v454, 0.0
        %457 = vrot.lane.b32.xlu0 %v455, 112
        %v458 = vpop.permute.xlu0 %457
        %460 = vrot.lane.b32.xlu0 %v455, 96
        %v461 = vpop.permute.xlu0 %460
        %463 = vrot.lane.b32.xlu0 %v455, 80
        %v464 = vpop.permute.xlu0 %463
        %466 = vrot.lane.b32.xlu0 %v455, 64
        %v467 = vpop.permute.xlu0 %466
        %469 = vrot.lane.b32.xlu0 %v455, 48
        %v470 = vpop.permute.xlu0 %469
        %472 = vrot.lane.b32.xlu0 %v455, 32
        %v473 = vpop.permute.xlu0 %472
        %475 = vrot.lane.b32.xlu0 %v455, 16
        %v476 = vpop.permute.xlu0 %475
        %v478 = vcombine.low %v455, %v461
        %v479 = vcombine.high %v455, %v461
        %v481 = vunpack.c.l.s4 1983009808
        %v482 = vunpack.c.0.s8 %v481
        %v483 = vlaneseq
        %v484 = vshrl.u32 %v483, 7
        %v485 = vsub.s32 %v482, %v484
        %v486 = vrot.slane %v478, %v485
        %v488 = vunpack.c.l.s4 1983009808
        %v489 = vunpack.c.0.s8 %v488
        %v490 = vlaneseq
        %v491 = vshrl.u32 %v490, 7
        %v492 = vsub.s32 %v489, %v491
        %v493 = vrot.slane %v479, %v492
        %v494 = vcombine.low %v458, %v464
        %v495 = vcombine.high %v458, %v464
        %v497 = vunpack.c.l.s4 1983009808
        %v498 = vunpack.c.0.s8 %v497
        %v499 = vlaneseq
        %v500 = vshrl.u32 %v499, 7
        %v501 = vsub.s32 %v498, %v500
        %v502 = vrot.slane %v494, %v501
        %v504 = vunpack.c.l.s4 1983009808
        %v505 = vunpack.c.0.s8 %v504
        %v506 = vlaneseq
        %v507 = vshrl.u32 %v506, 7
        %v508 = vsub.s32 %v505, %v507
        %v509 = vrot.slane %v495, %v508
        %v510 = vcombine.low %v467, %v473
        %v511 = vcombine.high %v467, %v473
        %v513 = vunpack.c.l.s4 1983009808
        %v514 = vunpack.c.0.s8 %v513
        %v515 = vlaneseq
        %v516 = vshrl.u32 %v515, 7
        %v517 = vsub.s32 %v514, %v516
        %v518 = vrot.slane %v510, %v517
        %v520 = vunpack.c.l.s4 1983009808
        %v521 = vunpack.c.0.s8 %v520
        %v522 = vlaneseq
        %v523 = vshrl.u32 %v522, 7
        %v524 = vsub.s32 %v521, %v523
        %v525 = vrot.slane %v511, %v524
        %v526 = vcombine.low %v470, %v476
        %v527 = vcombine.high %v470, %v476
        %v529 = vunpack.c.l.s4 1983009808
        %v530 = vunpack.c.0.s8 %v529
        %v531 = vlaneseq
        %v532 = vshrl.u32 %v531, 7
        %v533 = vsub.s32 %v530, %v532
        %v534 = vrot.slane %v526, %v533
        %v536 = vunpack.c.l.s4 1983009808
        %v537 = vunpack.c.0.s8 %v536
        %v538 = vlaneseq
        %v539 = vshrl.u32 %v538, 7
        %v540 = vsub.s32 %v537, %v539
        %v541 = vrot.slane %v527, %v540
        %v542 = vcombine.low %v486, %v502
        %v543 = vcombine.high %v486, %v502
        %v545 = vunpack.c.l.s4 1934713408
        %v546 = vunpack.c.0.s8 %v545
        %v547 = vlaneseq
        %v548 = vshrl.u32 %v547, 7
        %v549 = vsub.s32 %v546, %v548
        %v550 = vrot.slane %v542, %v549
        %v552 = vunpack.c.l.s4 1934713408
        %v553 = vunpack.c.0.s8 %v552
        %v554 = vlaneseq
        %v555 = vshrl.u32 %v554, 7
        %v556 = vsub.s32 %v553, %v555
        %v557 = vrot.slane %v543, %v556
        %v558 = vcombine.low %v493, %v509
        %v559 = vcombine.high %v493, %v509
        %v561 = vunpack.c.l.s4 1934713408
        %v562 = vunpack.c.0.s8 %v561
        %v563 = vlaneseq
        %v564 = vshrl.u32 %v563, 7
        %v565 = vsub.s32 %v562, %v564
        %v566 = vrot.slane %v558, %v565
        %v568 = vunpack.c.l.s4 1934713408
        %v569 = vunpack.c.0.s8 %v568
        %v570 = vlaneseq
        %v571 = vshrl.u32 %v570, 7
        %v572 = vsub.s32 %v569, %v571
        %v573 = vrot.slane %v559, %v572
        %v574 = vcombine.low %v518, %v534
        %v575 = vcombine.high %v518, %v534
        %v577 = vunpack.c.l.s4 1934713408
        %v578 = vunpack.c.0.s8 %v577
        %v579 = vlaneseq
        %v580 = vshrl.u32 %v579, 7
        %v581 = vsub.s32 %v578, %v580
        %v582 = vrot.slane %v574, %v581
        %v584 = vunpack.c.l.s4 1934713408
        %v585 = vunpack.c.0.s8 %v584
        %v586 = vlaneseq
        %v587 = vshrl.u32 %v586, 7
        %v588 = vsub.s32 %v585, %v587
        %v589 = vrot.slane %v575, %v588
        %v590 = vcombine.low %v525, %v541
        %v591 = vcombine.high %v525, %v541
        %v593 = vunpack.c.l.s4 1934713408
        %v594 = vunpack.c.0.s8 %v593
        %v595 = vlaneseq
        %v596 = vshrl.u32 %v595, 7
        %v597 = vsub.s32 %v594, %v596
        %v598 = vrot.slane %v590, %v597
        %v600 = vunpack.c.l.s4 1934713408
        %v601 = vunpack.c.0.s8 %v600
        %v602 = vlaneseq
        %v603 = vshrl.u32 %v602, 7
        %v604 = vsub.s32 %v601, %v603
        %v605 = vrot.slane %v591, %v604
        %v606 = vcombine.low %v550, %v582
        %v607 = vcombine.high %v550, %v582
        %v608 = vcombine.low %v557, %v589
        %v609 = vcombine.high %v557, %v589
        %v610 = vcombine.low %v566, %v598
        %v611 = vcombine.high %v566, %v598
        %v612 = vcombine.low %v573, %v605
        %v613 = vcombine.high %v573, %v605
        %v614 = vcombine.low %v606, %v608
        %v615 = vcombine.high %v606, %v608
        %v617 = vunpack.c.l.s4 1983009808
        %v618 = vunpack.c.0.s8 %v617
        %v619 = vlaneseq
        %v620 = vshrl.u32 %v619, 7
        %v621 = vsub.s32 %v618, %v620
        %v622 = vrot.slane %v614, %v621
        %v624 = vunpack.c.l.s4 1983009808
        %v625 = vunpack.c.0.s8 %v624
        %v626 = vlaneseq
        %v627 = vshrl.u32 %v626, 7
        %v628 = vsub.s32 %v625, %v627
        %v629 = vrot.slane %v615, %v628
        %v630 = vcombine.low %v607, %v609
        %v631 = vcombine.high %v607, %v609
        %v633 = vunpack.c.l.s4 1983009808
        %v634 = vunpack.c.0.s8 %v633
        %v635 = vlaneseq
        %v636 = vshrl.u32 %v635, 7
        %v637 = vsub.s32 %v634, %v636
        %v638 = vrot.slane %v630, %v637
        %v640 = vunpack.c.l.s4 1983009808
        %v641 = vunpack.c.0.s8 %v640
        %v642 = vlaneseq
        %v643 = vshrl.u32 %v642, 7
        %v644 = vsub.s32 %v641, %v643
        %v645 = vrot.slane %v631, %v644
        %v646 = vcombine.low %v610, %v612
        %v647 = vcombine.high %v610, %v612
        %v649 = vunpack.c.l.s4 1983009808
        %v650 = vunpack.c.0.s8 %v649
        %v651 = vlaneseq
        %v652 = vshrl.u32 %v651, 7
        %v653 = vsub.s32 %v650, %v652
        %v654 = vrot.slane %v646, %v653
        %v656 = vunpack.c.l.s4 1983009808
        %v657 = vunpack.c.0.s8 %v656
        %v658 = vlaneseq
        %v659 = vshrl.u32 %v658, 7
        %v660 = vsub.s32 %v657, %v659
        %v661 = vrot.slane %v647, %v660
        %v662 = vcombine.low %v611, %v613
        %v663 = vcombine.high %v611, %v613
        %v665 = vunpack.c.l.s4 1983009808
        %v666 = vunpack.c.0.s8 %v665
        %v667 = vlaneseq
        %v668 = vshrl.u32 %v667, 7
        %v669 = vsub.s32 %v666, %v668
        %v670 = vrot.slane %v662, %v669
        %v672 = vunpack.c.l.s4 1983009808
        %v673 = vunpack.c.0.s8 %v672
        %v674 = vlaneseq
        %v675 = vshrl.u32 %v674, 7
        %v676 = vsub.s32 %v673, %v675
        %v677 = vrot.slane %v663, %v676
        %v678 = vcombine.low %v622, %v638
        %v679 = vcombine.high %v622, %v638
        %v681 = vunpack.c.l.s4 1934713408
        %v682 = vunpack.c.0.s8 %v681
        %v683 = vlaneseq
        %v684 = vshrl.u32 %v683, 7
        %v685 = vsub.s32 %v682, %v684
        %v686 = vrot.slane %v678, %v685
        %v688 = vunpack.c.l.s4 1934713408
        %v689 = vunpack.c.0.s8 %v688
        %v690 = vlaneseq
        %v691 = vshrl.u32 %v690, 7
        %v692 = vsub.s32 %v689, %v691
        %v693 = vrot.slane %v679, %v692
        %v694 = vcombine.low %v629, %v645
        %v695 = vcombine.high %v629, %v645
        %v697 = vunpack.c.l.s4 1934713408
        %v698 = vunpack.c.0.s8 %v697
        %v699 = vlaneseq
        %v700 = vshrl.u32 %v699, 7
        %v701 = vsub.s32 %v698, %v700
        %v702 = vrot.slane %v694, %v701
        %v704 = vunpack.c.l.s4 1934713408
        %v705 = vunpack.c.0.s8 %v704
        %v706 = vlaneseq
        %v707 = vshrl.u32 %v706, 7
        %v708 = vsub.s32 %v705, %v707
        %v709 = vrot.slane %v695, %v708
        %v710 = vcombine.low %v654, %v670
        %v711 = vcombine.high %v654, %v670
        %v713 = vunpack.c.l.s4 1934713408
        %v714 = vunpack.c.0.s8 %v713
        %v715 = vlaneseq
        %v716 = vshrl.u32 %v715, 7
        %v717 = vsub.s32 %v714, %v716
        %v718 = vrot.slane %v710, %v717
        %v720 = vunpack.c.l.s4 1934713408
        %v721 = vunpack.c.0.s8 %v720
        %v722 = vlaneseq
        %v723 = vshrl.u32 %v722, 7
        %v724 = vsub.s32 %v721, %v723
        %v725 = vrot.slane %v711, %v724
        %v726 = vcombine.low %v661, %v677
        %v727 = vcombine.high %v661, %v677
        %v729 = vunpack.c.l.s4 1934713408
        %v730 = vunpack.c.0.s8 %v729
        %v731 = vlaneseq
        %v732 = vshrl.u32 %v731, 7
        %v733 = vsub.s32 %v730, %v732
        %v734 = vrot.slane %v726, %v733
        %v736 = vunpack.c.l.s4 1934713408
        %v737 = vunpack.c.0.s8 %v736
        %v738 = vlaneseq
        %v739 = vshrl.u32 %v738, 7
        %v740 = vsub.s32 %v737, %v739
        %v741 = vrot.slane %v727, %v740
        %v742 = vcombine.low %v686, %v718
        %v743 = vcombine.high %v686, %v718
        %v744 = vcombine.low %v693, %v725
        %v745 = vcombine.high %v693, %v725
        %v746 = vcombine.low %v702, %v734
        %v747 = vcombine.high %v702, %v734
        %v748 = vcombine.low %v709, %v741
        %v749 = vcombine.high %v709, %v741
        %v750 = vcombine.low %v742, %v744
        %v751 = vcombine.high %v742, %v744
        %v753 = vunpack.c.l.s4 1983009808
        %v754 = vunpack.c.0.s8 %v753
        %v755 = vlaneseq
        %v756 = vshrl.u32 %v755, 7
        %v757 = vsub.s32 %v754, %v756
        %v758 = vrot.slane %v750, %v757
        %v760 = vunpack.c.l.s4 1983009808
        %v761 = vunpack.c.0.s8 %v760
        %v762 = vlaneseq
        %v763 = vshrl.u32 %v762, 7
        %v764 = vsub.s32 %v761, %v763
        %v765 = vrot.slane %v751, %v764
        %v766 = vcombine.low %v743, %v745
        %v767 = vcombine.high %v743, %v745
        %v769 = vunpack.c.l.s4 1983009808
        %v770 = vunpack.c.0.s8 %v769
        %v771 = vlaneseq
        %v772 = vshrl.u32 %v771, 7
        %v773 = vsub.s32 %v770, %v772
        %v774 = vrot.slane %v766, %v773
        %v776 = vunpack.c.l.s4 1983009808
        %v777 = vunpack.c.0.s8 %v776
        %v778 = vlaneseq
        %v779 = vshrl.u32 %v778, 7
        %v780 = vsub.s32 %v777, %v779
        %v781 = vrot.slane %v767, %v780
        %v782 = vcombine.low %v746, %v748
        %v783 = vcombine.high %v746, %v748
        %v785 = vunpack.c.l.s4 1983009808
        %v786 = vunpack.c.0.s8 %v785
        %v787 = vlaneseq
        %v788 = vshrl.u32 %v787, 7
        %v789 = vsub.s32 %v786, %v788
        %v790 = vrot.slane %v782, %v789
        %v792 = vunpack.c.l.s4 1983009808
        %v793 = vunpack.c.0.s8 %v792
        %v794 = vlaneseq
        %v795 = vshrl.u32 %v794, 7
        %v796 = vsub.s32 %v793, %v795
        %v797 = vrot.slane %v783, %v796
        %v798 = vcombine.low %v747, %v749
        %v799 = vcombine.high %v747, %v749
        %v801 = vunpack.c.l.s4 1983009808
        %v802 = vunpack.c.0.s8 %v801
        %v803 = vlaneseq
        %v804 = vshrl.u32 %v803, 7
        %v805 = vsub.s32 %v802, %v804
        %v806 = vrot.slane %v798, %v805
        %v808 = vunpack.c.l.s4 1983009808
        %v809 = vunpack.c.0.s8 %v808
        %v810 = vlaneseq
        %v811 = vshrl.u32 %v810, 7
        %v812 = vsub.s32 %v809, %v811
        %v813 = vrot.slane %v799, %v812
        %v814 = vcombine.low %v758, %v774
        %v815 = vcombine.high %v758, %v774
        %v817 = vunpack.c.l.s4 1934713408
        %v818 = vunpack.c.0.s8 %v817
        %v819 = vlaneseq
        %v820 = vshrl.u32 %v819, 7
        %v821 = vsub.s32 %v818, %v820
        %v822 = vrot.slane %v814, %v821
        %v824 = vunpack.c.l.s4 1934713408
        %v825 = vunpack.c.0.s8 %v824
        %v826 = vlaneseq
        %v827 = vshrl.u32 %v826, 7
        %v828 = vsub.s32 %v825, %v827
        %v829 = vrot.slane %v815, %v828
        %v830 = vcombine.low %v765, %v781
        %v831 = vcombine.high %v765, %v781
        %v833 = vunpack.c.l.s4 1934713408
        %v834 = vunpack.c.0.s8 %v833
        %v835 = vlaneseq
        %v836 = vshrl.u32 %v835, 7
        %v837 = vsub.s32 %v834, %v836
        %v838 = vrot.slane %v830, %v837
        %v840 = vunpack.c.l.s4 1934713408
        %v841 = vunpack.c.0.s8 %v840
        %v842 = vlaneseq
        %v843 = vshrl.u32 %v842, 7
        %v844 = vsub.s32 %v841, %v843
        %v845 = vrot.slane %v831, %v844
        %v846 = vcombine.low %v790, %v806
        %v847 = vcombine.high %v790, %v806
        %v849 = vunpack.c.l.s4 1934713408
        %v850 = vunpack.c.0.s8 %v849
        %v851 = vlaneseq
        %v852 = vshrl.u32 %v851, 7
        %v853 = vsub.s32 %v850, %v852
        %v854 = vrot.slane %v846, %v853
        %v856 = vunpack.c.l.s4 1934713408
        %v857 = vunpack.c.0.s8 %v856
        %v858 = vlaneseq
        %v859 = vshrl.u32 %v858, 7
        %v860 = vsub.s32 %v857, %v859
        %v861 = vrot.slane %v847, %v860
        %v862 = vcombine.low %v797, %v813
        %v863 = vcombine.high %v797, %v813
        %v865 = vunpack.c.l.s4 1934713408
        %v866 = vunpack.c.0.s8 %v865
        %v867 = vlaneseq
        %v868 = vshrl.u32 %v867, 7
        %v869 = vsub.s32 %v866, %v868
        %v870 = vrot.slane %v862, %v869
        %v872 = vunpack.c.l.s4 1934713408
        %v873 = vunpack.c.0.s8 %v872
        %v874 = vlaneseq
        %v875 = vshrl.u32 %v874, 7
        %v876 = vsub.s32 %v873, %v875
        %v877 = vrot.slane %v863, %v876
        %v878 = vcombine.low %v822, %v854
        %v879 = vcombine.high %v822, %v854
        %v880 = vcombine.low %v829, %v861
        %v881 = vcombine.high %v829, %v861
        %v882 = vcombine.low %v838, %v870
        %v883 = vcombine.high %v838, %v870
        %v884 = vcombine.low %v845, %v877
        %v885 = vcombine.high %v845, %v877
        %887 = vrot.lane.b32.xlu0 %v879, 16
        %v888 = vpop.permute.xlu0 %887
        %891 = vrot.lane.b32.xlu0 %v880, 32
        %v892 = vpop.permute.xlu0 %891
        %895 = vrot.lane.b32.xlu0 %v881, 48
        %v896 = vpop.permute.xlu0 %895
        %899 = vrot.lane.b32.xlu0 %v882, 64
        %v900 = vpop.permute.xlu0 %899
        %903 = vrot.lane.b32.xlu0 %v883, 80
        %v904 = vpop.permute.xlu0 %903
        %907 = vrot.lane.b32.xlu0 %v884, 96
        %v908 = vpop.permute.xlu0 %907
        %911 = vrot.lane.b32.xlu0 %v885, 112
        %v912 = vpop.permute.xlu0 %911
        %v914 = vsel %vm397, %v878, %v888
        %vm915 = vcmask 261120
        %v916 = vsel %vm915, %v914, %v892
        %vm917 = vcmask 392192
        %v918 = vsel %vm917, %v916, %v896
        %vm919 = vcmask 523264
        %v920 = vsel %vm919, %v918, %v900
        %vm921 = vcmask 654336
        %v922 = vsel %vm921, %v920, %v904
        %vm923 = vcmask 785408
        %v924 = vsel %vm923, %v922, %v908
        %vm925 = vcmask 916480
        %v926 = vsel %vm925, %v924, %v912
        %v927 = vpack.c.bf16 %v926, %v926
        %928 = vst [vmem:[%s229] sm:$0xf] %v927
        %s929 = sand.u32 %s132, 1
        %s930 = scalar_lea.sflag [#allocation4], %s929
        %s931 = sand.u32 %s132, 1
        %s932 = smul.addr %s931, 4
        %s933 = scalar_lea.vmem [#allocation5], %s932
        // Predicated region
        $region41: #{tpu_custom_call.1} parent=35 // pred_check
          %p934 = pneg %p142
        $region42: #{tpu_custom_call.1} parent=35 // pred_check_branch
          %936 = sbr.rel (%p934) target = $region44
        $region43: #{tpu_custom_call.1} parent=35 // pred_region
          %s938 = ssub.s32 64, 64
          %939 = vsyncadd %s930, %s938
          %s940 = smul.addr %s25, 2
          %s941 = sadd.s32 %s26, %s940
          %s942 = smul.addr %s941, 64
          %s943 = scalar_lea.hbm %s4, %s942
          %s945 = sshll.u32 %s933, 4
          %s946 = int_to_ptr.vmem [resolvable:$true] %s945
          %948 = dma.vmem_to_hbm [thread:$0]  %s946, 64, %s943, %s930
        $region44: #{tpu_custom_call.1} parent=35 // pred_fallthru
          _
      $region36: #{tpu_custom_call.1} parent=5 // pred_fallthru
        _
      %p949 = scmp.le.s32.totalorder 2, %s16
      // Predicated region
      $region45: #{tpu_custom_call.1} parent=5 // pred_check
        %p950 = pneg %p949
      $region46: #{tpu_custom_call.1} parent=5 // pred_check_branch
        %952 = sbr.rel (%p950) target = $region48
      $region47: #{tpu_custom_call.1} parent=5 // pred_region
        %s953 = ssub.s32 %s16, 2
        // Predicated region
        $region49: #{tpu_custom_call.1} parent=47 // pred_check
          %p954 = pneg %p148
        $region50: #{tpu_custom_call.1} parent=47 // pred_check_branch
          %956 = sbr.rel (%p954) target = $region52
        $region51: #{tpu_custom_call.1} parent=47 // pred_region
          %s957 = sand.u32 %s133, 1
          %s958 = scalar_lea.sflag [#allocation4], %s957
          %s959 = sand.u32 %s133, 1
          %s960 = smul.addr %s959, 4
          %s961 = scalar_lea.vmem [#allocation5], %s960
          %962 = dma.done %s958, 64
        $region52: #{tpu_custom_call.1} parent=47 // pred_fallthru
          _
      $region48: #{tpu_custom_call.1} parent=5 // pred_fallthru
        _
    $region6: #{tpu_custom_call.1} parent=1 // loop_footer
      %s20 = sadd.s32 1, %s16
    $region7: #{tpu_custom_call.1} parent=1 // loop_footer_branch
      %15 = sbr.rel target = $region3
    $region8: #{tpu_custom_call.1} parent=1 // loop_exit
      _
    %963 = vsyncpa [#allocation3], 1
    %s964 = scalar_lea.sflag [#allocation3], 1
    %965 = vsyncpa %s964, 1
    %966 = vsyncpa [#allocation4], 1
    %s967 = scalar_lea.sflag [#allocation4], 1
    %968 = vsyncpa %s967, 1

</llo_original>
